<compile_context>
chip_gen: v6e
topology: v6e:2x2x1
jax: 0.10.0
libtpu: 0.0.40
codegen_flags: <defaults>
</compile_context>

<pallas_src>
import functools
import math

import jax
import jax.numpy as jnp
from jax.experimental import pallas as pl
from jax.experimental.pallas import tpu as pltpu


# --------------------------------------------------------------------------- helpers

def _bce_elementwise(p, t):
    # PyTorch BCELoss(reduction='none'): -(t*log(p) + (1-t)*log(1-p)), logs clamped at -100.
    logp = jnp.maximum(jnp.log(p), -100.0)
    log1mp = jnp.maximum(jnp.log(1.0 - p), -100.0)
    return -(t * logp + (1.0 - t) * log1mp)


def _round_up(x, m):
    return (x + m - 1) // m * m


def _pad_flat(flat, total, pad_value):
    n = flat.shape[0]
    if total == n:
        return flat
    return jnp.concatenate(
        [flat, jnp.full((total - n,), pad_value, dtype=flat.dtype)])


# ------------------------------------------------------------------ small (fused) path

def _fused_kernel(x_ref, o_ref, *, mse_scale):
    # x_ref: (6, rows, 128) — [p1, t1, p2, t2, p3, g3] stacked (single input DMA).
    p1 = x_ref[0].astype(jnp.float32)
    t1 = x_ref[1].astype(jnp.float32)
    p2 = x_ref[2].astype(jnp.float32)
    t2 = x_ref[3].astype(jnp.float32)
    p3 = x_ref[4].astype(jnp.float32)
    g3 = x_ref[5].astype(jnp.float32)

    d = p3 - g3
    # 0.01 / N folded into a single trace-time constant — no runtime reciprocal.
    mse_w = jnp.sum(d * d) * jnp.float32(mse_scale)

    o_ref[...] = (_bce_elementwise(p1, t1) + _bce_elementwise(p2, t2) + mse_w
                  ).astype(o_ref.dtype)


def _small_path(p1, t1, p2, t2, p3, g3, n_true, out_dtype):
    lanes = 128
    rows = _round_up(pl.cdiv(n_true, lanes), 8)
    total = rows * lanes
    # Padding is neutral: (0.5, 0.5) gives a finite BCE value (sliced off later),
    # (0, 0) contributes nothing to the MSE sum.
    x = jnp.stack([
        _pad_flat(p1, total, 0.5).reshape(rows, lanes),
        _pad_flat(t1, total, 0.5).reshape(rows, lanes),
        _pad_flat(p2, total, 0.5).reshape(rows, lanes),
        _pad_flat(t2, total, 0.5).reshape(rows, lanes),
        _pad_flat(p3, total, 0.0).reshape(rows, lanes),
        _pad_flat(g3, total, 0.0).reshape(rows, lanes),
    ])  # (6, rows, lanes), original dtype — cast happens inside the kernel.

    out = pl.pallas_call(
        functools.partial(_fused_kernel, mse_scale=0.01 / float(n_true)),
        out_shape=jax.ShapeDtypeStruct((rows, lanes), out_dtype),
        in_specs=[pl.BlockSpec(memory_space=pltpu.VMEM)],
        out_specs=pl.BlockSpec(memory_space=pltpu.VMEM),
    )(x)
    return out.reshape(-1)[:n_true]


# ------------------------------------------------------------------- tiled (large) path

def _mse_partial_kernel(pg_ref, o_ref, *, mse_scale):
    # pg_ref: (2, tile_rows, lanes) = [p3, g3] tile; o_ref: resident (1,1) accumulator.
    @pl.when(pl.program_id(0) == 0)
    def _init():
        o_ref[...] = jnp.zeros_like(o_ref)

    d = pg_ref[0].astype(jnp.float32) - pg_ref[1].astype(jnp.float32)
    o_ref[...] = o_ref[...] + jnp.reshape(jnp.sum(d * d), (1, 1))

    @pl.when(pl.program_id(0) == pl.num_programs(0) - 1)
    def _finish():
        # Apply the folded (0.01 / N) weight once, at the end.
        o_ref[...] = o_ref[...] * jnp.float32(mse_scale)


def _bce_add_kernel(mse_ref, x_ref, o_ref):
    # mse_ref: (1,1) f32 in SMEM (already weighted); x_ref: (4, tile_rows, lanes).
    p1 = x_ref[0].astype(jnp.float32)
    t1 = x_ref[1].astype(jnp.float32)
    p2 = x_ref[2].astype(jnp.float32)
    t2 = x_ref[3].astype(jnp.float32)
    mse_w = mse_ref[0, 0]
    o_ref[...] = (_bce_elementwise(p1, t1) + _bce_elementwise(p2, t2) + mse_w
                  ).astype(o_ref.dtype)


def _tiled_path(p1, t1, p2, t2, p3, g3, n_true, out_dtype):
    lanes = 512                       # wide lane-dense slabs -> unmasked vld/vst
    tile_rows_cap = 128               # (128, 512) f32 tile = 256 KiB per slab
    rows_needed = pl.cdiv(n_true, lanes)
    tile_rows = min(tile_rows_cap, _round_up(rows_needed, 8))
    rows = _round_up(rows_needed, tile_rows)
    total = rows * lanes
    grid = rows // tile_rows

    mse_scale = 0.01 / float(n_true)
    # Explicit scoped-VMEM budget (generous for these tiles, but matters on v5e's
    # 16 MiB default; well inside v7x's 64 MiB physical VMEM).
    cparams = dict(vmem_limit_bytes=32 * 1024 * 1024)

    # Pass 1: MSE partial-sum reduction over row tiles (sequential accumulator).
    pg = jnp.stack([_pad_flat(p3, total, 0.0).reshape(rows, lanes),
                    _pad_flat(g3, total, 0.0).reshape(rows, lanes)])
    mse = pl.pallas_call(
        functools.partial(_mse_partial_kernel, mse_scale=mse_scale),
        out_shape=jax.ShapeDtypeStruct((1, 1), jnp.float32),
        grid=(grid,),
        in_specs=[pl.BlockSpec((2, tile_rows, lanes), lambda i: (0, i, 0))],
        out_specs=pl.BlockSpec((1, 1), lambda i: (0, 0)),
        compiler_params=pltpu.CompilerParams(
            dimension_semantics=("arbitrary",), **cparams),
    )(pg)

    # Pass 2: elementwise BCE + broadcast-add of the weighted MSE scalar
    # ("parallel" grid axis -> shards across the 2 TensorCores on v7x).
    x = jnp.stack([_pad_flat(p1, total, 0.5).reshape(rows, lanes),
                   _pad_flat(t1, total, 0.5).reshape(rows, lanes),
                   _pad_flat(p2, total, 0.5).reshape(rows, lanes),
                   _pad_flat(t2, total, 0.5).reshape(rows, lanes)])
    out = pl.pallas_call(
        _bce_add_kernel,
        out_shape=jax.ShapeDtypeStruct((rows, lanes), out_dtype),
        grid=(grid,),
        in_specs=[pl.BlockSpec(memory_space=pltpu.SMEM),
                  pl.BlockSpec((4, tile_rows, lanes), lambda i: (0, i, 0))],
        out_specs=pl.BlockSpec((tile_rows, lanes), lambda i: (i, 0)),
        compiler_params=pltpu.CompilerParams(
            dimension_semantics=("parallel",), **cparams),
    )(mse, x)
    return out.reshape(-1)[:n_true]


# --------------------------------------------------------------------------- wrapper

def total_loss(out, tg1, tg2, gt3, *, small_path_max_bytes=8 * 1024 * 1024):
    """JAX/Pallas equivalent of TotalLoss.forward(out, tg1, tg2, gt3)."""
    out0, out1, out2 = out
    assert (out0.shape == tg1.shape == out1.shape == tg2.shape
            == out2.shape == gt3.shape), "all operands must share a shape"
    orig_shape = out0.shape
    n_true = math.prod(orig_shape)
    out_dtype = jnp.result_type(out0.dtype, out1.dtype, tg1.dtype,
                                tg2.dtype, out2.dtype, gt3.dtype)

    flats = [x.reshape(-1) for x in (out0, tg1, out1, tg2, out2, gt3)]

    approx_bytes = 7 * n_true * 4  # 6 inputs + 1 output, f32-equivalent footprint
    if approx_bytes <= small_path_max_bytes:
        flat = _small_path(*flats, n_true, out_dtype)
    else:
        flat = _tiled_path(*flats, n_true, out_dtype)
    return flat.reshape(orig_shape)


# --------------------------------------------------------------------------- reference

def _reference(out, tg1, tg2, gt3):
    def bce(p, t):
        return -(t * jnp.maximum(jnp.log(p), -100.0)
                 + (1.0 - t) * jnp.maximum(jnp.log(1.0 - p), -100.0))
    mse = jnp.mean((out[2] - gt3) ** 2)
    return bce(out[0], tg1) + bce(out[1], tg2) + mse * 0.01


if __name__ == "__main__":
    key = jax.random.PRNGKey(0)
    k0, k1, k2, k3, k4, k5 = jax.random.split(key, 6)

    # Small case (NCHW = 2,4,16,16) — single fused, stacked-input kernel.
    shape = (2, 4, 16, 16)
    out0 = jax.nn.sigmoid(jax.random.normal(k0, shape, dtype=jnp.float32))
    out1 = jax.nn.sigmoid(jax.random.normal(k1, shape, dtype=jnp.float32))
    out2 = jax.random.normal(k2, shape, dtype=jnp.float32)
    tg1 = jax.random.uniform(k3, shape, dtype=jnp.float32)
    tg2 = jax.random.uniform(k4, shape, dtype=jnp.float32)
    gt3 = jax.random.normal(k5, shape, dtype=jnp.float32)

    loss = jax.block_until_ready(total_loss((out0, out1, out2), tg1, tg2, gt3))
    ref = _reference((out0, out1, out2), tg1, tg2, gt3)
    assert loss.shape == shape
    assert jnp.allclose(loss, ref, atol=1e-5, rtol=1e-5), "small-path mismatch"

    # Larger case exercises the tiled, pipelined two-pass path (grid of 8 tiles).
    big = (4, 8, 128, 128)
    b0 = jax.nn.sigmoid(jax.random.normal(k0, big, dtype=jnp.float32))
    b1 = jax.nn.sigmoid(jax.random.normal(k1, big, dtype=jnp.float32))
    b2 = jax.random.normal(k2, big, dtype=jnp.float32)
    bt1 = jax.random.uniform(k3, big, dtype=jnp.float32)
    bt2 = jax.random.uniform(k4, big, dtype=jnp.float32)
    bg3 = jax.random.normal(k5, big, dtype=jnp.float32)

    loss_big = jax.block_until_ready(total_loss((b0, b1, b2), bt1, bt2, bg3))
    ref_big = _reference((b0, b1, b2), bt1, bt2, bg3)
    assert loss_big.shape == big
    assert jnp.allclose(loss_big, ref_big, atol=1e-4, rtol=1e-5), "tiled-path mismatch"

    print("KERNEL_OK")
</pallas_src>

<mosaic_0001>
module attributes {stable_mosaic.version = 11 : i64} {
  func.func @_fused_kernel(%arg0: memref<6x16x128xf32, #tpu.memory_space<vmem>>, %arg1: memref<16x128xf32, #tpu.memory_space<vmem>>) attributes {dimension_semantics = [], scalar_prefetch = 0 : i64, scratch_operands = 0 : i64, tpu.core_type = #tpu.core_type<tc>} {
    %c0 = arith.constant 0 : index
    %c0_0 = arith.constant 0 : index
    %c0_1 = arith.constant 0 : index
    %0 = vector.load %arg0[%c0, %c0_0, %c0_1] : memref<6x16x128xf32, #tpu.memory_space<vmem>>, vector<1x16x128xf32>
    %1 = vector.shape_cast %0 : vector<1x16x128xf32> to vector<16x128xf32>
    %c1 = arith.constant 1 : index
    %c0_2 = arith.constant 0 : index
    %c0_3 = arith.constant 0 : index
    %2 = vector.load %arg0[%c1, %c0_2, %c0_3] : memref<6x16x128xf32, #tpu.memory_space<vmem>>, vector<1x16x128xf32>
    %3 = vector.shape_cast %2 : vector<1x16x128xf32> to vector<16x128xf32>
    %c2 = arith.constant 2 : index
    %c0_4 = arith.constant 0 : index
    %c0_5 = arith.constant 0 : index
    %4 = vector.load %arg0[%c2, %c0_4, %c0_5] : memref<6x16x128xf32, #tpu.memory_space<vmem>>, vector<1x16x128xf32>
    %5 = vector.shape_cast %4 : vector<1x16x128xf32> to vector<16x128xf32>
    %c3 = arith.constant 3 : index
    %c0_6 = arith.constant 0 : index
    %c0_7 = arith.constant 0 : index
    %6 = vector.load %arg0[%c3, %c0_6, %c0_7] : memref<6x16x128xf32, #tpu.memory_space<vmem>>, vector<1x16x128xf32>
    %7 = vector.shape_cast %6 : vector<1x16x128xf32> to vector<16x128xf32>
    %c4 = arith.constant 4 : index
    %c0_8 = arith.constant 0 : index
    %c0_9 = arith.constant 0 : index
    %8 = vector.load %arg0[%c4, %c0_8, %c0_9] : memref<6x16x128xf32, #tpu.memory_space<vmem>>, vector<1x16x128xf32>
    %9 = vector.shape_cast %8 : vector<1x16x128xf32> to vector<16x128xf32>
    %c5 = arith.constant 5 : index
    %c0_10 = arith.constant 0 : index
    %c0_11 = arith.constant 0 : index
    %10 = vector.load %arg0[%c5, %c0_10, %c0_11] : memref<6x16x128xf32, #tpu.memory_space<vmem>>, vector<1x16x128xf32>
    %11 = vector.shape_cast %10 : vector<1x16x128xf32> to vector<16x128xf32>
    %12 = arith.subf %9, %11 : vector<16x128xf32>
    %13 = arith.mulf %12, %12 : vector<16x128xf32>
    %14 = vector.shape_cast %13 : vector<16x128xf32> to vector<1x16x128xf32>
    %cst = arith.constant dense<0.000000e+00> : vector<1xf32>
    %15 = vector.multi_reduction <add>, %14, %cst [1, 2] : vector<1x16x128xf32> to vector<1xf32>
    %16 = vector.shape_cast %15 : vector<1xf32> to vector<1x1x1xf32>
    %17 = vector.extract %16[0, 0, 0] : f32 from vector<1x1x1xf32>
    %cst_12 = arith.constant 4.88281239E-6 : f32
    %18 = arith.mulf %17, %cst_12 : f32
    %19 = math.log %1 : vector<16x128xf32>
    %cst_13 = arith.constant -1.000000e+02 : f32
    %20 = vector.broadcast %cst_13 : f32 to vector<16x128xf32>
    %21 = arith.maximumf %19, %20 : vector<16x128xf32>
    %cst_14 = arith.constant 1.000000e+00 : f32
    %22 = vector.broadcast %cst_14 : f32 to vector<16x128xf32>
    %23 = arith.subf %22, %1 : vector<16x128xf32>
    %24 = math.log %23 : vector<16x128xf32>
    %cst_15 = arith.constant -1.000000e+02 : f32
    %25 = vector.broadcast %cst_15 : f32 to vector<16x128xf32>
    %26 = arith.maximumf %24, %25 : vector<16x128xf32>
    %27 = arith.mulf %3, %21 : vector<16x128xf32>
    %cst_16 = arith.constant 1.000000e+00 : f32
    %28 = vector.broadcast %cst_16 : f32 to vector<16x128xf32>
    %29 = arith.subf %28, %3 : vector<16x128xf32>
    %30 = arith.mulf %29, %26 : vector<16x128xf32>
    %31 = arith.addf %27, %30 : vector<16x128xf32>
    %cst_17 = arith.constant 0.000000e+00 : f32
    %32 = vector.broadcast %cst_17 : f32 to vector<16x128xf32>
    %33 = arith.subf %32, %31 : vector<16x128xf32>
    %34 = math.log %5 : vector<16x128xf32>
    %cst_18 = arith.constant -1.000000e+02 : f32
    %35 = vector.broadcast %cst_18 : f32 to vector<16x128xf32>
    %36 = arith.maximumf %34, %35 : vector<16x128xf32>
    %cst_19 = arith.constant 1.000000e+00 : f32
    %37 = vector.broadcast %cst_19 : f32 to vector<16x128xf32>
    %38 = arith.subf %37, %5 : vector<16x128xf32>
    %39 = math.log %38 : vector<16x128xf32>
    %cst_20 = arith.constant -1.000000e+02 : f32
    %40 = vector.broadcast %cst_20 : f32 to vector<16x128xf32>
    %41 = arith.maximumf %39, %40 : vector<16x128xf32>
    %42 = arith.mulf %7, %36 : vector<16x128xf32>
    %cst_21 = arith.constant 1.000000e+00 : f32
    %43 = vector.broadcast %cst_21 : f32 to vector<16x128xf32>
    %44 = arith.subf %43, %7 : vector<16x128xf32>
    %45 = arith.mulf %44, %41 : vector<16x128xf32>
    %46 = arith.addf %42, %45 : vector<16x128xf32>
    %cst_22 = arith.constant 0.000000e+00 : f32
    %47 = vector.broadcast %cst_22 : f32 to vector<16x128xf32>
    %48 = arith.subf %47, %46 : vector<16x128xf32>
    %49 = arith.addf %33, %48 : vector<16x128xf32>
    %50 = vector.broadcast %18 : f32 to vector<16x128xf32>
    %51 = arith.addf %49, %50 : vector<16x128xf32>
    %c0_23 = arith.constant 0 : index
    %c0_24 = arith.constant 0 : index
    %52 = vector.load %arg1[%c0_23, %c0_24] : memref<16x128xf32, #tpu.memory_space<vmem>>, vector<16x128xf32>
    tpu.vector_store %arg1[%c0_23, %c0_24], %51 {strides = array<i32>} : memref<16x128xf32, #tpu.memory_space<vmem>>, vector<16x128xf32>,
    return
  }
}

</mosaic_0001>

<llo_original>
// kernel: tpu_custom_call.1
$region0: #{tpu_custom_call.1}
  #allocation0 [shape = 'u32[]', space=smem, size = 0x4, offset = 0x4, fixed_abs, tag = 'smem constant byte address 0x4 - core index']
  #allocation1 [shape = 'u32[144,128]{1,0:T(1,128)}', space=vmem, size = 0x12000, scoped, tag = 'internal scratch']
  %s0 = inlined_call_operand.hbm [shape: f32[6,16,128], index: 0, kind: input, shape index: {}]
  %s1 = inlined_call_operand.hbm [shape: f32[16,128], index: 1, kind: output, shape index: {}]
  %s2 = sld [smem:[#allocation0]]
  $region18: #{tpu_custom_call.1} parent=0
    _
  %s4 = ssub.s32 1, %s2
  %s5 = scalar_select 0, %s4, %s2
  $region1: #{tpu_custom_call.1} parent=0
    #allocation2 [shape = 'u8[49152]{0}', space=vmem, size = 0xc000, scoped, tag = 'input window, operand 0, single buffered']
    #allocation3 [shape = 's32[1]{0}', space=sflag, size = 0x4, scoped, tag = 'scoped memory for tpu_custom_call.1']
    #allocation4 [shape = 's32[1]{0}', space=sflag, size = 0x4, scoped, tag = 'scoped memory for tpu_custom_call.1']
    #allocation5 [shape = 'u8[8192]{0}', space=vmem, size = 0x2000, scoped, tag = 'output window, operand 0, single buffered']
    %6 = vsyncpa [#allocation3], 0
    %7 = vsyncpa [#allocation4], 0
    // Predicated region
    $region2: #{tpu_custom_call.1} parent=1 // pred_check
      _
    $region3: #{tpu_custom_call.1} parent=1 // pred_check_branch
      %9 = sbr.rel (0) target = $region5
    $region4: #{tpu_custom_call.1} parent=1 // pred_region
      %s11 = ssub.s32 1536, 1536
      %12 = vsyncadd [#allocation3], %s11
      %s13 = sshll.u32 [#allocation2], 4
      %s14 = int_to_ptr.vmem [resolvable:$true] %s13
      %19 = dma.hbm_to_vmem [thread:$0]  %s0, 1536, %s14, [#allocation3], 128, 128, 8
    $region5: #{tpu_custom_call.1} parent=1 // pred_fallthru
      _
    // Predicated region
    $region6: #{tpu_custom_call.1} parent=1 // pred_check
      _
    $region7: #{tpu_custom_call.1} parent=1 // pred_check_branch
      %21 = sbr.rel (0) target = $region9
    $region8: #{tpu_custom_call.1} parent=1 // pred_region
      %22 = dma.done [#allocation3], 1536
    $region9: #{tpu_custom_call.1} parent=1 // pred_fallthru
      _
    %v23 = vld [vmem:[#allocation2] sm:$0xff]
    %v24 = vld [vmem:[#allocation2 + $0x8] sm:$0xff]
    %s25 = scalar_lea.vmem [#allocation2], 16
    %v26 = vld [vmem:[%s25] sm:$0xff]
    %v27 = vld [vmem:[%s25 + $0x8] sm:$0xff]
    %s28 = scalar_lea.vmem [#allocation2], 32
    %v29 = vld [vmem:[%s28] sm:$0xff]
    %v30 = vld [vmem:[%s28 + $0x8] sm:$0xff]
    %s31 = scalar_lea.vmem [#allocation2], 48
    %v32 = vld [vmem:[%s31] sm:$0xff]
    %v33 = vld [vmem:[%s31 + $0x8] sm:$0xff]
    %s34 = scalar_lea.vmem [#allocation2], 64
    %v35 = vld [vmem:[%s34] sm:$0xff]
    %v36 = vld [vmem:[%s34 + $0x8] sm:$0xff]
    %s37 = scalar_lea.vmem [#allocation2], 80
    %v38 = vld [vmem:[%s37] sm:$0xff]
    %v39 = vld [vmem:[%s37 + $0x8] sm:$0xff]
    %v40 = vsub.f32 %v35, %v38
    %v41 = vsub.f32 %v36, %v39
    %v42 = vmul.f32 %v40, %v40
    %v43 = vmul.f32 %v41, %v41
    %v44 = vadd.f32 %v42, %v43
    %45 = vadd.xlane.f32.xlu0 %v44
    %v46 = vpop.xlane.xlu0 %45
    %v47 = vrot.slane %v46, 4
    %v48 = vadd.f32 %v46, %v47
    %v49 = vrot.slane %v48, 2
    %v50 = vadd.f32 %v48, %v49
    %v51 = vrot.slane %v50, 1
    %v52 = vadd.f32 %v50, %v51
    %s53 = vtos %v52
    %s54 = smul.f32 %s53, 4.8828124e-06
    %v55 = vlog2.pop %v23
    %v56 = vmul.f32 %v55, 0.6931472
    %v57 = vlog2.pop %v24
    %v58 = vmul.f32 %v57, 0.6931472
    %v59 = vmax.f32 %v56, -100.0
    %v60 = vmax.f32 %v58, -100.0
    %v61 = vsub.f32 1.0, %v23
    %v62 = vsub.f32 1.0, %v24
    %v63 = vlog2.pop %v61
    %v64 = vmul.f32 %v63, 0.6931472
    %v65 = vlog2.pop %v62
    %v66 = vmul.f32 %v65, 0.6931472
    %v67 = vmax.f32 %v64, -100.0
    %v68 = vmax.f32 %v66, -100.0
    %v69 = vmul.f32 %v26, %v59
    %v70 = vmul.f32 %v27, %v60
    %v71 = vsub.f32 1.0, %v26
    %v72 = vsub.f32 1.0, %v27
    %v73 = vmul.f32 %v71, %v67
    %v74 = vmul.f32 %v72, %v68
    %v75 = vadd.f32 %v69, %v73
    %v76 = vadd.f32 %v70, %v74
    %v77 = vsub.f32 0.0, %v75
    %v78 = vsub.f32 0.0, %v76
    %v79 = vlog2.pop %v29
    %v80 = vmul.f32 %v79, 0.6931472
    %v81 = vlog2.pop %v30
    %v82 = vmul.f32 %v81, 0.6931472
    %v83 = vmax.f32 %v80, -100.0
    %v84 = vmax.f32 %v82, -100.0
    %v85 = vsub.f32 1.0, %v29
    %v86 = vsub.f32 1.0, %v30
    %v87 = vlog2.pop %v85
    %v88 = vmul.f32 %v87, 0.6931472
    %v89 = vlog2.pop %v86
    %v90 = vmul.f32 %v89, 0.6931472
    %v91 = vmax.f32 %v88, -100.0
    %v92 = vmax.f32 %v90, -100.0
    %v93 = vmul.f32 %v32, %v83
    %v94 = vmul.f32 %v33, %v84
    %v95 = vsub.f32 1.0, %v32
    %v96 = vsub.f32 1.0, %v33
    %v97 = vmul.f32 %v95, %v91
    %v98 = vmul.f32 %v96, %v92
    %v99 = vadd.f32 %v93, %v97
    %v100 = vadd.f32 %v94, %v98
    %v101 = vsub.f32 0.0, %v99
    %v102 = vsub.f32 0.0, %v100
    %v103 = vadd.f32 %v77, %v101
    %v104 = vadd.f32 %v78, %v102
    %v105 = vstv %s54
    %v106 = vadd.f32 %v103, %v105
    %v107 = vadd.f32 %v104, %v105
    %108 = vst [vmem:[#allocation5] sm:$0xff] %v106
    %109 = vst [vmem:[#allocation5 + $0x8] sm:$0xff] %v107
    // Predicated region
    $region10: #{tpu_custom_call.1} parent=1 // pred_check
      _
    $region11: #{tpu_custom_call.1} parent=1 // pred_check_branch
      %111 = sbr.rel (0) target = $region13
    $region12: #{tpu_custom_call.1} parent=1 // pred_region
      %s113 = ssub.s32 256, 256
      %114 = vsyncadd [#allocation4], %s113
      %s115 = sshll.u32 [#allocation5], 4
      %s116 = int_to_ptr.vmem [resolvable:$true] %s115
      %121 = dma.vmem_to_hbm [thread:$0]  %s116, 256, %s1, [#allocation4], 128, 128, 8
    $region13: #{tpu_custom_call.1} parent=1 // pred_fallthru
      _
    // Predicated region
    $region14: #{tpu_custom_call.1} parent=1 // pred_check
      _
    $region15: #{tpu_custom_call.1} parent=1 // pred_check_branch
      %123 = sbr.rel (0) target = $region17
    $region16: #{tpu_custom_call.1} parent=1 // pred_region
      %124 = dma.done [#allocation4], 256
    $region17: #{tpu_custom_call.1} parent=1 // pred_fallthru
      _
    %125 = vsyncpa [#allocation3], 1
    %126 = vsyncpa [#allocation4], 1

</llo_original>
